<compile_context>
chip_gen: v6e
topology: v6e:2x2x1
jax: 0.10.0
libtpu: 0.0.40
codegen_flags: <defaults>
</compile_context>

<pallas_src>
import jax
import jax.numpy as jnp
from jax.experimental import pallas as pl
from jax.experimental.pallas import tpu as pltpu

_MAX_TILE_BYTES = 4 * 1024 * 1024      # per-buffer block size
_VMEM_LIMIT_BYTES = 32 * 1024 * 1024   # 4x tile (double-buffered in+out) + headroom


def _identity_kernel(x_ref, o_ref):
    # Pure copy of the current (tile_rows, tile_cols) block.
    o_ref[...] = x_ref[...]


def _sublane_pack(itemsize):
    # Native sublane pack: 8 rows for 32-bit, 16 for bf16/fp16, 32 for int8/fp8.
    return 8 * max(1, 4 // itemsize)


def _widest_lane_divisor(n, cap):
    """Largest multiple of 128 that divides n and is <= cap (requires n % 128 == 0)."""
    m = n // 128
    k_max = max(1, min(m, cap // 128))
    for k in range(k_max, 0, -1):      # k_max <= ~1024, trace-time only
        if m % k == 0:
            return 128 * k
    return 128


def _lane_dense_view_shape(n, itemsize, max_tile_bytes):
    """2-D view (rows, cols) of a flat array of n elements, lane-dense."""
    pack = _sublane_pack(itemsize)
    if n % 128 == 0:
        # Widest multiple-of-128 row that (a) divides n, (b) leaves room for a
        # pack-row tile within the byte budget, (c) keeps >= pack rows when the
        # array is big enough (full vreg sublane utilisation).
        cap = max(128, (max_tile_bytes // (pack * itemsize)) // 128 * 128)
        if n // pack >= 128:
            cap = min(cap, (n // pack) // 128 * 128)
        cols = _widest_lane_divisor(n, cap)
        return n // cols, cols
    # Ragged element count: one flat row; the lane axis is tiled in multiples
    # of 128 and the tail block is masked by Pallas.
    return 1, n


def _pick_block(rows, cols, itemsize, max_tile_bytes):
    """Block shape: row dim is the full extent or a multiple of the sublane
    pack; lane dim is the full extent or a multiple of 128; block bytes stay
    under max_tile_bytes (small inputs collapse to one full-extent block)."""
    pack = _sublane_pack(itemsize)
    if rows * cols * itemsize <= max_tile_bytes:
        return rows, cols                                  # one grid step
    base_rows = min(rows, pack)
    lane_budget = max(1, max_tile_bytes // (base_rows * itemsize))
    if cols <= lane_budget:
        tile_c = cols                                      # keep full lane width
    else:
        tile_c = max(128, (lane_budget // 128) * 128)      # widest 128-multiple
    tile_r = (max_tile_bytes // (tile_c * itemsize)) // pack * pack
    tile_r = max(base_rows, min(tile_r, rows))
    return tile_r, tile_c


def identity_activation(x, *, max_tile_bytes=_MAX_TILE_BYTES):
    """Pallas identity: returns an array equal to `x` (same shape & dtype).

    For a true zero-copy identity, jit the caller with donate_argnums on `x`;
    the pallas_call aliases its output to the input buffer.
    """
    orig_shape = x.shape
    if x.size == 0:
        return x

    n = int(x.size)
    itemsize = x.dtype.itemsize
    rows, cols = _lane_dense_view_shape(n, itemsize, max_tile_bytes)
    x2 = x.reshape(rows, cols)

    tile_r, tile_c = _pick_block(rows, cols, itemsize, max_tile_bytes)
    grid = (pl.cdiv(rows, tile_r), pl.cdiv(cols, tile_c))

    out2 = pl.pallas_call(
        _identity_kernel,
        out_shape=jax.ShapeDtypeStruct((rows, cols), x2.dtype),
        grid_spec=pltpu.PrefetchScalarGridSpec(
            num_scalar_prefetch=0,
            grid=grid,
            in_specs=[pl.BlockSpec((tile_r, tile_c), lambda i, j: (i, j))],
            out_specs=pl.BlockSpec((tile_r, tile_c), lambda i, j: (i, j)),
        ),
        input_output_aliases={0: 0},
        compiler_params=pltpu.CompilerParams(
            dimension_semantics=("parallel", "parallel"),
            vmem_limit_bytes=_VMEM_LIMIT_BYTES,
        ),
        cost_estimate=pl.CostEstimate(
            flops=0, transcendentals=0, bytes_accessed=2 * n * itemsize
        ),
    )(x2)
    return out2.reshape(orig_shape)


if __name__ == "__main__":
    key = jax.random.PRNGKey(0)
    k1, k2, k3, k4 = jax.random.split(key, 4)

    # 4-D f32 input: flattens to an (8, 256) lane-dense slab, single grid step.
    x = jax.random.normal(k1, (2, 4, 16, 16), dtype=jnp.float32)
    y = jax.block_until_ready(identity_activation(x))
    assert y.shape == x.shape and y.dtype == x.dtype
    assert bool(jnp.array_equal(y, x)), "identity mismatch (f32 4-D)"

    # bf16 input: exercises the dtype-aware (16-row) sublane pack.
    xb = jax.random.normal(k2, (4, 8, 32), dtype=jnp.bfloat16)
    yb = jax.block_until_ready(identity_activation(xb))
    assert yb.shape == xb.shape and yb.dtype == xb.dtype
    assert bool(jnp.array_equal(yb, xb)), "identity mismatch (bf16 3-D)"

    # Multi-step "parallel" grid: tile budget overridden to force 4 row tiles.
    xg = jax.random.normal(k3, (128, 512), dtype=jnp.float32)
    yg = jax.block_until_ready(identity_activation(xg, max_tile_bytes=64 * 1024))
    assert yg.shape == xg.shape and yg.dtype == xg.dtype
    assert bool(jnp.array_equal(yg, xg)), "identity mismatch (tiled grid)"

    # Ragged element count (not a multiple of 128): masked tail lane block.
    xr = jax.random.normal(k4, (1000,), dtype=jnp.float32)
    yr = jax.block_until_ready(identity_activation(xr, max_tile_bytes=2048))
    assert yr.shape == xr.shape and yr.dtype == xr.dtype
    assert bool(jnp.array_equal(yr, xr)), "identity mismatch (ragged 1-D)"

    print("KERNEL_OK")
</pallas_src>

<mosaic_0001>
module attributes {stable_mosaic.version = 11 : i64} {
  func.func @_identity_kernel(%arg0: i32, %arg1: i32, %arg2: memref<8x256xf32, #tpu.memory_space<vmem>>, %arg3: memref<8x256xf32, #tpu.memory_space<vmem>>) attributes {dimension_semantics = [#tpu.dimension_semantics<parallel>, #tpu.dimension_semantics<parallel>], iteration_bounds = array<i64: 1, 1>, scalar_prefetch = 0 : i64, scratch_operands = 0 : i64, tpu.core_type = #tpu.core_type<tc>, window_params = [{transform_indices = @transform_0, window_bounds = array<i64: 8, 256>}, {transform_indices = @transform_1, window_bounds = array<i64: 8, 256>}]} {
    %c0 = arith.constant 0 : index
    %c0_0 = arith.constant 0 : index
    %0 = vector.load %arg2[%c0, %c0_0] : memref<8x256xf32, #tpu.memory_space<vmem>>, vector<8x256xf32>
    %c0_1 = arith.constant 0 : index
    %c0_2 = arith.constant 0 : index
    %1 = vector.load %arg3[%c0_1, %c0_2] : memref<8x256xf32, #tpu.memory_space<vmem>>, vector<8x256xf32>
    tpu.vector_store %arg3[%c0_1, %c0_2], %0 {strides = array<i32>} : memref<8x256xf32, #tpu.memory_space<vmem>>, vector<8x256xf32>,
    return
  }
  func.func @transform_0(%arg0: i32, %arg1: i32) -> (i32, i32) {
    %c0_i32 = arith.constant 0 : i32
    return %arg0, %arg1 : i32, i32
  }
  func.func @transform_1(%arg0: i32, %arg1: i32) -> (i32, i32) {
    %c0_i32 = arith.constant 0 : i32
    return %arg0, %arg1 : i32, i32
  }
}

</mosaic_0001>

<llo_original>
// kernel: tpu_custom_call.1
$region0: #{tpu_custom_call.1}
  #allocation0 [shape = 'u32[]', space=smem, size = 0x4, offset = 0x4, fixed_abs, tag = 'smem constant byte address 0x4 - core index']
  #allocation1 [shape = 'u32[144,128]{1,0:T(1,128)}', space=vmem, size = 0x12000, scoped, tag = 'internal scratch']
  %s0 = inlined_call_operand.hbm [shape: f32[8,256], index: 0, kind: input, shape index: {}, may-alias: {0,1}]
  %s1 = inlined_call_operand.hbm [shape: f32[8,256], index: 1, kind: output, shape index: {}, may-alias: {0,1}]
  %s2 = sld [smem:[#allocation0]]
  $region18: #{tpu_custom_call.1} parent=0
    _
  %s4 = ssub.s32 1, %s2
  %s5 = scalar_select 0, %s4, %s2
  $region1: #{tpu_custom_call.1} parent=0
    #allocation2 [shape = 'u8[8192]{0}', space=vmem, size = 0x2000, scoped, tag = 'input window, operand 0, single buffered']
    #allocation3 [shape = 's32[1]{0}', space=sflag, size = 0x4, scoped, tag = 'scoped memory for tpu_custom_call.1']
    #allocation4 [shape = 's32[1]{0}', space=sflag, size = 0x4, scoped, tag = 'scoped memory for tpu_custom_call.1']
    #allocation5 [shape = 'u8[8192]{0}', space=vmem, size = 0x2000, scoped, tag = 'output window, operand 0, single buffered']
    %6 = vsyncpa [#allocation3], 0
    %7 = vsyncpa [#allocation4], 0
    // Predicated region
    $region2: #{tpu_custom_call.1} parent=1 // pred_check
      _
    $region3: #{tpu_custom_call.1} parent=1 // pred_check_branch
      %9 = sbr.rel (0) target = $region5
    $region4: #{tpu_custom_call.1} parent=1 // pred_region
      %s11 = ssub.s32 256, 256
      %12 = vsyncadd [#allocation3], %s11
      %s14 = sshll.u32 [#allocation2], 4
      %s15 = int_to_ptr.vmem [resolvable:$true] %s14
      %17 = dma.hbm_to_vmem [thread:$0]  %s0, 256, %s15, [#allocation3]
    $region5: #{tpu_custom_call.1} parent=1 // pred_fallthru
      _
    // Predicated region
    $region6: #{tpu_custom_call.1} parent=1 // pred_check
      _
    $region7: #{tpu_custom_call.1} parent=1 // pred_check_branch
      %19 = sbr.rel (0) target = $region9
    $region8: #{tpu_custom_call.1} parent=1 // pred_region
      %20 = dma.done [#allocation3], 256
    $region9: #{tpu_custom_call.1} parent=1 // pred_fallthru
      _
    %v21 = vld [vmem:[#allocation2] sm:$0xff]
    %v22 = vld [vmem:[#allocation2 + $0x8] sm:$0xff]
    %23 = vst [vmem:[#allocation5] sm:$0xff] %v21
    %24 = vst [vmem:[#allocation5 + $0x8] sm:$0xff] %v22
    // Predicated region
    $region10: #{tpu_custom_call.1} parent=1 // pred_check
      _
    $region11: #{tpu_custom_call.1} parent=1 // pred_check_branch
      %26 = sbr.rel (0) target = $region13
    $region12: #{tpu_custom_call.1} parent=1 // pred_region
      %s28 = ssub.s32 256, 256
      %29 = vsyncadd [#allocation4], %s28
      %s31 = sshll.u32 [#allocation5], 4
      %s32 = int_to_ptr.vmem [resolvable:$true] %s31
      %34 = dma.vmem_to_hbm [thread:$0]  %s32, 256, %s1, [#allocation4]
    $region13: #{tpu_custom_call.1} parent=1 // pred_fallthru
      _
    // Predicated region
    $region14: #{tpu_custom_call.1} parent=1 // pred_check
      _
    $region15: #{tpu_custom_call.1} parent=1 // pred_check_branch
      %36 = sbr.rel (0) target = $region17
    $region16: #{tpu_custom_call.1} parent=1 // pred_region
      %37 = dma.done [#allocation4], 256
    $region17: #{tpu_custom_call.1} parent=1 // pred_fallthru
      _
    %38 = vsyncpa [#allocation3], 1
    %39 = vsyncpa [#allocation4], 1

</llo_original>
